<compile_context>
chip_gen: v7x
topology: tpu7x:2x2x1
jax: 0.10.0
libtpu: 0.0.40
codegen_flags: <defaults>
</compile_context>

<pallas_src>
import functools

import jax
import jax.numpy as jnp
from jax.experimental import pallas as pl
from jax.experimental.pallas import tpu as pltpu

Nc = 12
E_DIM = 64 * 2            # 128
ATT_HID = 100             # logical attention hidden size (PyTorch)
ATT_HID_PAD = 128         # lane-padded hidden size used inside the kernel
LANE = 128                # lane-dense output width (>= Nc)


# ----------------------------------------------------------------------------
# Fused per-sample kernel (one grid step = one (x1, x2) sample):
#   ht  = xcat @ wm                     (Tb, 128)   [== cat(e1, e2) by block-diag pack]
#   ha  = tanh(ht @ w1_pad + b1_pad)    (Tb, 128)   [pad lanes are exactly 0]
#   alp = tanh(sum(ha * w2_row, lane) + b2)          (Tb, 1)   [VPU + lane reduce]
#   al  = softmax(alp, over Tb)                      (Tb, 1)
#   u   = sum_t al_t * ht_t                          (1, 128)
#   out = u @ wc_pad                                 (1, 1, 128) [lanes >= Nc are 0]
# ----------------------------------------------------------------------------
def _make_kernel(w2in):
    def kernel(x_ref, w_ref, b_ref, o_ref):
        x = x_ref[0]                                         # (Tb, 2*in_dim)

        # Static-row-range slices of the packed weight / bias slabs.
        wm = w_ref[0:w2in, :]                                # (2*in_dim, 128)
        w1 = w_ref[w2in:w2in + E_DIM, :]                     # (128, 128)
        wc = w_ref[w2in + E_DIM:w2in + 2 * E_DIM, :]         # (128, 128)
        b1 = b_ref[0:1, :]                                   # (1, 128)
        w2r = b_ref[1:2, :]                                  # (1, 128)
        b2 = b_ref[2:3, 0:1]                                 # (1, 1)

        # Merged sub-model projection (block-diagonal x pack => cat(e1, e2)).
        ht = jnp.dot(x, wm, preferred_element_type=jnp.float32)      # (Tb, 128)

        # Attention MLP (hidden padded 100 -> 128; pad lanes stay 0).
        ha = jnp.tanh(
            jnp.dot(ht, w1, preferred_element_type=jnp.float32) + b1)  # (Tb, 128)

        # N=1 projection: VPU multiply + lane reduce instead of an MXU matmul.
        alp = jnp.tanh(jnp.sum(ha * w2r, axis=1, keepdims=True) + b2)  # (Tb, 1)

        # Softmax over the Tb axis (== PyTorch Softmax(dim=1) on (1, Tb, 1)).
        m = jnp.max(alp, axis=0, keepdims=True)
        e = jnp.exp(alp - m)
        al = e / jnp.sum(e, axis=0, keepdims=True)           # exact division

        # Attention pooling + bias-free classifier (lane-dense padded output).
        u = jnp.sum(al * ht, axis=0, keepdims=True)          # (1, 128)
        o_ref[...] = jnp.dot(
            u, wc, preferred_element_type=jnp.float32).reshape(1, 1, LANE)

    return kernel


# ----------------------------------------------------------------------------
# Wrapper: block-diagonal input packing + batched pallas_call.
#   x1: (B, T1, in_dim), x2: (B, T2, in_dim)  ->  out: (B, Nc)
# ----------------------------------------------------------------------------
@functools.partial(jax.jit, static_argnames=())
def ccsl_net_forward(packed, x1, x2):
    B, T1, in_dim = x1.shape
    B2, T2, in_dim2 = x2.shape
    assert B2 == B and in_dim2 == in_dim
    # Sublane-tile alignment (f32 tile = 8 rows).  Zero-row padding of Tb would
    # change the softmax, so we require alignment instead of padding.
    # TODO(synk): add explicit -inf masking if ragged T1/T2 must be supported.
    assert T1 % 8 == 0 and T2 % 8 == 0, "T1/T2 must be multiples of 8"
    Tb = T1 + T2
    w2in = 2 * in_dim
    assert w2in % 8 == 0, "2*in_dim must be a multiple of 8"

    # Block-diagonal packing so ONE matmul against vstack(wm1, wm2) yields
    # cat(e1, e2) directly (no per-sample split writes inside the kernel).
    top = jnp.concatenate([x1, jnp.zeros((B, T1, in_dim), x1.dtype)], axis=-1)
    bot = jnp.concatenate([jnp.zeros((B, T2, in_dim), x2.dtype), x2], axis=-1)
    xcat = jnp.concatenate([top, bot], axis=1)               # (B, Tb, 2*in_dim)

    w_slab = packed["w_slab"]                                # (2*in_dim + 256, 128)
    b_slab = packed["b_slab"]                                # (8, 128)

    # Advisory cost for XLA scheduling around the custom call.
    flops = B * (2 * Tb * w2in * E_DIM            # merged projection
                 + 2 * Tb * E_DIM * ATT_HID_PAD   # attention MLP
                 + 2 * Tb * E_DIM                 # lane reduce + pooling
                 + 2 * E_DIM * LANE)              # classifier
    transcendentals = B * (Tb * ATT_HID_PAD + 2 * Tb)        # tanh, tanh, exp
    bytes_accessed = 4 * (xcat.size + w_slab.size + b_slab.size + B * LANE)

    out_pad = pl.pallas_call(
        _make_kernel(w2in),
        out_shape=jax.ShapeDtypeStruct((B, 1, LANE), jnp.float32),
        grid=(B,),
        in_specs=[
            # Per-sample activation block.
            pl.BlockSpec((1, Tb, w2in), lambda b: (b, 0, 0)),
            # Weight / bias slabs: constant index_maps -> VMEM-resident across
            # grid steps (DMA'd once).
            pl.BlockSpec((w2in + 2 * E_DIM, E_DIM), lambda b: (0, 0)),
            pl.BlockSpec((8, LANE), lambda b: (0, 0)),
        ],
        out_specs=pl.BlockSpec((1, 1, LANE), lambda b: (b, 0, 0)),
        compiler_params=pltpu.CompilerParams(
            dimension_semantics=("parallel",)),
        cost_estimate=pl.CostEstimate(
            flops=flops,
            transcendentals=transcendentals,
            bytes_accessed=bytes_accessed),
    )(xcat, w_slab, b_slab)

    return out_pad[:, 0, :Nc]                                # (B, Nc)


# ----------------------------------------------------------------------------
# Params: canonical (PyTorch-shaped) init + one-time packed slabs.
# ----------------------------------------------------------------------------
def init_params(key, in_dim):
    ks = jax.random.split(key, 6)
    s = 0.05
    return {
        "wm1": s * jax.random.normal(ks[0], (in_dim, E_DIM), jnp.float32),
        "wm2": s * jax.random.normal(ks[1], (in_dim, E_DIM), jnp.float32),
        "w1": s * jax.random.normal(ks[2], (E_DIM, ATT_HID), jnp.float32),
        "b1": s * jax.random.normal(ks[3], (1, ATT_HID), jnp.float32),
        "w2": s * jax.random.normal(ks[4], (ATT_HID, 1), jnp.float32),
        "b2": jnp.zeros((1, 1), jnp.float32),
        "wc": s * jax.random.normal(ks[5], (E_DIM, Nc), jnp.float32),
    }


def pack_params(p):
    """Build the two DMA slabs.

    w_slab rows: [wm1; wm2]            (2*in_dim, 128)
                 [w1  zero-padded]     (128, 128)   pad lanes (100->128) = 0
                 [wc  zero-padded]     (128, 128)   pad lanes (12->128)  = 0
    b_slab rows: 0: b1 (padded to 128, pad = 0)
                 1: w2 row vector (padded to 128, pad = 0)
                 2: [b2, 0, 0, ...]
                 3..7: zeros (sublane-tile fill)
    """
    pad_h = ATT_HID_PAD - ATT_HID
    wm = jnp.concatenate([p["wm1"], p["wm2"]], axis=0)            # (2*in_dim, 128)
    w1p = jnp.pad(p["w1"], ((0, 0), (0, pad_h)))                  # (128, 128)
    wcp = jnp.pad(p["wc"], ((0, 0), (0, LANE - Nc)))              # (128, 128)
    w_slab = jnp.concatenate([wm, w1p, wcp], axis=0)              # (2*in_dim+256, 128)

    b1p = jnp.pad(p["b1"], ((0, 0), (0, pad_h)))                  # (1, 128)
    w2row = jnp.pad(p["w2"].T, ((0, 0), (0, pad_h)))              # (1, 128)
    b2row = jnp.pad(p["b2"], ((0, 0), (0, LANE - 1)))             # (1, 128)
    b_slab = jnp.concatenate(
        [b1p, w2row, b2row, jnp.zeros((5, LANE), jnp.float32)], axis=0)  # (8, 128)

    return {"w_slab": w_slab, "b_slab": b_slab}


if __name__ == "__main__":
    key = jax.random.PRNGKey(0)
    k_p, k_x1, k_x2 = jax.random.split(key, 3)

    in_dim = 32          # feature dim fed to the model1/model2 stand-ins
    T1, T2 = 8, 8        # frames produced by each sub-model (Tb = 16)
    B = 2                # samples batched into one pallas_call

    params = init_params(k_p, in_dim)
    packed = pack_params(params)

    x1 = jax.random.normal(k_x1, (B, T1, in_dim), jnp.float32)
    x2 = jax.random.normal(k_x2, (B, T2, in_dim), jnp.float32)

    out = ccsl_net_forward(packed, x1, x2)
    out = jax.block_until_ready(out)

    assert out.shape == (B, Nc), out.shape
    assert jnp.all(jnp.isfinite(out))

    # Pure-JAX per-sample reference of the whole forward (canonical params).
    def ref_fwd(x1_s, x2_s):
        e1 = x1_s @ params["wm1"]
        e2 = x2_s @ params["wm2"]
        ht = jnp.concatenate([e1, e2], axis=0)
        ha = jnp.tanh(ht @ params["w1"] + params["b1"])
        alp = jnp.tanh(ha @ params["w2"] + params["b2"])
        al = jax.nn.softmax(alp, axis=0)
        u = (al * ht).sum(axis=0, keepdims=True)
        return (u @ params["wc"])[0]

    ref = jax.vmap(ref_fwd)(x1, x2)                               # (B, Nc)
    assert jnp.allclose(out, ref, atol=2e-4, rtol=2e-4), (
        jnp.max(jnp.abs(out - ref)))

    print("KERNEL_OK")
</pallas_src>

<mosaic_0001>
module attributes {stable_mosaic.version = 11 : i64} {
  func.func @kernel(%arg0: i32, %arg1: memref<1x16x64xf32, #tpu.memory_space<vmem>>, %arg2: memref<320x128xf32, #tpu.memory_space<vmem>>, %arg3: memref<8x128xf32, #tpu.memory_space<vmem>>, %arg4: memref<1x1x128xf32, #tpu.memory_space<vmem>>) attributes {dimension_semantics = [#tpu.dimension_semantics<parallel>], iteration_bounds = array<i64: 2>, scalar_prefetch = 0 : i64, scratch_operands = 0 : i64, tpu.core_type = #tpu.core_type<tc>, window_params = [{transform_indices = @transform_0, window_bounds = array<i64: 1, 16, 64>}, {pipeline_mode = #tpu.pipeline_mode<synchronous>, transform_indices = @transform_1, window_bounds = array<i64: 320, 128>}, {pipeline_mode = #tpu.pipeline_mode<synchronous>, transform_indices = @transform_2, window_bounds = array<i64: 8, 128>}, {transform_indices = @transform_3, window_bounds = array<i64: 1, 1, 128>}]} {
    %c0 = arith.constant 0 : index
    %c0_0 = arith.constant 0 : index
    %c0_1 = arith.constant 0 : index
    %0 = vector.load %arg1[%c0, %c0_0, %c0_1] : memref<1x16x64xf32, #tpu.memory_space<vmem>>, vector<1x16x64xf32>
    %1 = vector.shape_cast %0 : vector<1x16x64xf32> to vector<16x64xf32>
    %c0_2 = arith.constant 0 : index
    %c0_3 = arith.constant 0 : index
    %2 = vector.load %arg2[%c0_2, %c0_3] : memref<320x128xf32, #tpu.memory_space<vmem>>, vector<64x128xf32>
    %c64 = arith.constant 64 : index
    %c0_4 = arith.constant 0 : index
    %3 = vector.load %arg2[%c64, %c0_4] : memref<320x128xf32, #tpu.memory_space<vmem>>, vector<128x128xf32>
    %c192 = arith.constant 192 : index
    %c0_5 = arith.constant 0 : index
    %4 = vector.load %arg2[%c192, %c0_5] : memref<320x128xf32, #tpu.memory_space<vmem>>, vector<128x128xf32>
    %c0_6 = arith.constant 0 : index
    %c0_7 = arith.constant 0 : index
    %5 = vector.load %arg3[%c0_6, %c0_7] : memref<8x128xf32, #tpu.memory_space<vmem>>, vector<1x128xf32>
    %c1 = arith.constant 1 : index
    %c0_8 = arith.constant 0 : index
    %6 = vector.load %arg3[%c1, %c0_8] : memref<8x128xf32, #tpu.memory_space<vmem>>, vector<1x128xf32>
    %c2 = arith.constant 2 : index
    %c0_9 = arith.constant 0 : index
    %7 = vector.load %arg3[%c2, %c0_9] : memref<8x128xf32, #tpu.memory_space<vmem>>, vector<1x1xf32>
    %cst = arith.constant dense<0.000000e+00> : vector<16x128xf32>
    %8 = tpu.matmul %1, %2, %cst {dimension_numbers = #tpu.dot_dimension_numbers<[1], [0], [0], [1], [0, 0, 1, 1], [], []>} : vector<16x64xf32>, vector<64x128xf32>, vector<16x128xf32> -> vector<16x128xf32>
    %cst_10 = arith.constant dense<0.000000e+00> : vector<16x128xf32>
    %9 = tpu.matmul %8, %3, %cst_10 {dimension_numbers = #tpu.dot_dimension_numbers<[1], [0], [0], [1], [0, 0, 1, 1], [], []>} : vector<16x128xf32>, vector<128x128xf32>, vector<16x128xf32> -> vector<16x128xf32>
    %10 = vector.broadcast %5 : vector<1x128xf32> to vector<16x128xf32>
    %11 = arith.addf %9, %10 : vector<16x128xf32>
    %12 = math.tanh %11 : vector<16x128xf32>
    %13 = vector.broadcast %6 : vector<1x128xf32> to vector<16x128xf32>
    %14 = arith.mulf %12, %13 : vector<16x128xf32>
    %cst_11 = arith.constant dense<0.000000e+00> : vector<16xf32>
    %15 = vector.multi_reduction <add>, %14, %cst_11 [1] : vector<16x128xf32> to vector<16xf32>
    %16 = vector.shape_cast %15 : vector<16xf32> to vector<16x1xf32>
    %17 = vector.broadcast %7 : vector<1x1xf32> to vector<16x1xf32>
    %18 = arith.addf %16, %17 : vector<16x1xf32>
    %19 = math.tanh %18 : vector<16x1xf32>
    %cst_12 = arith.constant dense<0xFF800000> : vector<1xf32>
    %20 = vector.multi_reduction <maximumf>, %19, %cst_12 [0] : vector<16x1xf32> to vector<1xf32>
    %21 = vector.shape_cast %20 : vector<1xf32> to vector<1x1xf32>
    %22 = vector.broadcast %21 : vector<1x1xf32> to vector<16x1xf32>
    %23 = arith.subf %19, %22 : vector<16x1xf32>
    %24 = math.exp %23 : vector<16x1xf32>
    %cst_13 = arith.constant dense<0.000000e+00> : vector<1xf32>
    %25 = vector.multi_reduction <add>, %24, %cst_13 [0] : vector<16x1xf32> to vector<1xf32>
    %26 = vector.shape_cast %25 : vector<1xf32> to vector<1x1xf32>
    %27 = vector.broadcast %26 : vector<1x1xf32> to vector<16x1xf32>
    %28 = arith.divf %24, %27 : vector<16x1xf32>
    %29 = vector.broadcast %28 : vector<16x1xf32> to vector<16x128xf32>
    %30 = arith.mulf %29, %8 : vector<16x128xf32>
    %cst_14 = arith.constant dense<0.000000e+00> : vector<128xf32>
    %31 = vector.multi_reduction <add>, %30, %cst_14 [0] : vector<16x128xf32> to vector<128xf32>
    %32 = vector.shape_cast %31 : vector<128xf32> to vector<1x128xf32>
    %cst_15 = arith.constant dense<0.000000e+00> : vector<1x128xf32>
    %33 = tpu.matmul %32, %4, %cst_15 {dimension_numbers = #tpu.dot_dimension_numbers<[1], [0], [0], [1], [0, 0, 1, 1], [], []>} : vector<1x128xf32>, vector<128x128xf32>, vector<1x128xf32> -> vector<1x128xf32>
    %34 = vector.shape_cast %33 : vector<1x128xf32> to vector<1x1x128xf32>
    %c0_16 = arith.constant 0 : index
    %c0_17 = arith.constant 0 : index
    %c0_18 = arith.constant 0 : index
    %35 = vector.load %arg4[%c0_16, %c0_17, %c0_18] : memref<1x1x128xf32, #tpu.memory_space<vmem>>, vector<1x1x128xf32>
    tpu.vector_store %arg4[%c0_16, %c0_17, %c0_18], %34 {strides = array<i32>} : memref<1x1x128xf32, #tpu.memory_space<vmem>>, vector<1x1x128xf32>,
    return
  }
  func.func @transform_0(%arg0: i32) -> (i32, i32, i32) {
    %c0_i32 = arith.constant 0 : i32
    %c0_i32_0 = arith.constant 0 : i32
    %c0_i32_1 = arith.constant 0 : i32
    return %arg0, %c0_i32, %c0_i32_0 : i32, i32, i32
  }
  func.func @transform_1(%arg0: i32) -> (i32, i32) {
    %c0_i32 = arith.constant 0 : i32
    %c0_i32_0 = arith.constant 0 : i32
    %c0_i32_1 = arith.constant 0 : i32
    return %c0_i32, %c0_i32_0 : i32, i32
  }
  func.func @transform_2(%arg0: i32) -> (i32, i32) {
    %c0_i32 = arith.constant 0 : i32
    %c0_i32_0 = arith.constant 0 : i32
    %c0_i32_1 = arith.constant 0 : i32
    return %c0_i32, %c0_i32_0 : i32, i32
  }
  func.func @transform_3(%arg0: i32) -> (i32, i32, i32) {
    %c0_i32 = arith.constant 0 : i32
    %c0_i32_0 = arith.constant 0 : i32
    %c0_i32_1 = arith.constant 0 : i32
    return %arg0, %c0_i32, %c0_i32_0 : i32, i32, i32
  }
}

</mosaic_0001>

<llo_original>
// kernel: ccsl_net_forward.1
$region0: #{ccsl_net_forward.1}
  #allocation0 [shape = 'u32[]', space=smem, size = 0x4, offset = 0x4, fixed_abs, tag = 'smem constant byte address 0x4 - core index']
  #allocation1 [shape = 'u32[144,128]{1,0:T(1,128)}', space=vmem, size = 0x12000, scoped, tag = 'internal scratch']
  %s0 = inlined_call_operand.vmem [shape: f32[2,16,64], index: 0, kind: input, shape index: {}]
  %s1 = inlined_call_operand.hbm [shape: f32[320,128], index: 1, kind: input, shape index: {}]
  %s2 = inlined_call_operand.vmem [shape: f32[8,128], index: 2, kind: input, shape index: {}]
  %s3 = inlined_call_operand.hbm [shape: f32[2,1,128], index: 3, kind: output, shape index: {}]
  %s4 = sld [smem:[#allocation0]]
  $region49: #{ccsl_net_forward.1} parent=0
    _
  %s6 = ssub.s32 1, %s4
  %s7 = scalar_select 0, %s6, %s4
  $region1: #{ccsl_net_forward.1} parent=0
    #allocation2 [shape = 'u8[163840]{0}', space=vmem, size = 0x28000, scoped, tag = 'input window, operand 1, single buffered']
    #allocation3 [shape = 's32[2]{0}', space=sflag, size = 0x8, scoped, tag = 'scoped memory for ccsl_net_forward.1']
    #allocation4 [shape = 's32[2]{0}', space=sflag, size = 0x8, scoped, tag = 'scoped memory for ccsl_net_forward.1']
    #allocation5 [shape = 'u8[1024]{0}', space=vmem, size = 0x400, scoped, tag = 'output window, operand 0']
    %8 = vsyncpa [#allocation3], 0
    %9 = vsyncpa [#allocation4], 0
    %s10 = scalar_lea.sflag [#allocation4], 1
    %11 = vsyncpa %s10, 0
    loop: start=0, step=1, limit=4
    $region2: #{ccsl_net_forward.1} parent=1 // loop_pre_header
      _
    $region3: #{ccsl_net_forward.1} parent=1 // loop_header
      %s13 = sphi 0, %s17
      %p14 = scmp.ge.s32.totalorder %s13, 4
      %s23 = sphi 0, %s25
      %s26 = sphi 0, %s23
      %s27 = sphi 0, %s26
      %s43 = sphi 0, %s27
      %s47 = sphi 0, %s47
      %s49 = sphi 0, %s47
      %s50 = sphi 0, %s49
      %s64 = sphi 0, %s50
      %s68 = sphi 0, %s68
      %s70 = sphi 0, %s68
      %s71 = sphi 0, %s70
      %s85 = sphi 0, %s71
      %s91 = sphi 0, %s93
      %s94 = sphi 0, %s91
      %s95 = sphi 0, %s94
      %s111 = sphi 0, %s95
    $region4: #{ccsl_net_forward.1} parent=1 // loop_header_branch
      %16 = sbr.rel (%p14) target = $region8
    $region5: #{ccsl_net_forward.1} parent=1 // loop_body
      %s18 = ssub.s32 %s13, 1
      %s19 = ssub.s32 %s13, 2
      %s20 = sadd.s32 %s13, 1
      %s21 = ssub.s32 %s13, %s20
      %p22 = scmp.eq.s32.totalorder %s21, 0
      %s24 = sadd.s32 %s23, 1
      %s25 = scalar_select %p22, %s23, %s24
      %p28 = pneg %p22
      %p29 = scmp.eq.s32.totalorder %s13, 1
      %p30 = por %p28, %p29
      %p31 = scmp.ne.s32.totalorder %s23, %s26
      %p32 = scmp.eq.s32.totalorder %s13, 0
      %p33 = por %p31, %p32
      %p34 = scmp.ne.s32.totalorder %s23, %s26
      %p35 = scmp.eq.s32.totalorder %s18, 1
      %p36 = por %p34, %p35
      %p37 = scmp.ne.s32.totalorder %s26, %s27
      %p38 = scmp.eq.s32.totalorder %s18, 0
      %p39 = por %p37, %p38
      %p40 = scmp.ne.s32.totalorder %s26, %s27
      %p41 = scmp.eq.s32.totalorder %s19, 1
      %p42 = por %p40, %p41
      %p44 = scmp.ne.s32.totalorder %s27, %s43
      %p45 = scmp.eq.s32.totalorder %s19, 0
      %p46 = por %p44, %p45
      %s48 = sadd.s32 %s47, 1
      %p51 = scmp.eq.s32.totalorder %s13, 1
      %p52 = scmp.ne.s32.totalorder %s47, %s49
      %p53 = scmp.eq.s32.totalorder %s13, 0
      %p54 = por %p52, %p53
      %p55 = scmp.ne.s32.totalorder %s47, %s49
      %p56 = scmp.eq.s32.totalorder %s18, 1
      %p57 = por %p55, %p56
      %p58 = scmp.ne.s32.totalorder %s49, %s50
      %p59 = scmp.eq.s32.totalorder %s18, 0
      %p60 = por %p58, %p59
      %p61 = scmp.ne.s32.totalorder %s49, %s50
      %p62 = scmp.eq.s32.totalorder %s19, 1
      %p63 = por %p61, %p62
      %p65 = scmp.ne.s32.totalorder %s50, %s64
      %p66 = scmp.eq.s32.totalorder %s19, 0
      %p67 = por %p65, %p66
      %s69 = sadd.s32 %s68, 1
      %p72 = scmp.eq.s32.totalorder %s13, 1
      %p73 = scmp.ne.s32.totalorder %s68, %s70
      %p74 = scmp.eq.s32.totalorder %s13, 0
      %p75 = por %p73, %p74
      %p76 = scmp.ne.s32.totalorder %s68, %s70
      %p77 = scmp.eq.s32.totalorder %s18, 1
      %p78 = por %p76, %p77
      %p79 = scmp.ne.s32.totalorder %s70, %s71
      %p80 = scmp.eq.s32.totalorder %s18, 0
      %p81 = por %p79, %p80
      %p82 = scmp.ne.s32.totalorder %s70, %s71
      %p83 = scmp.eq.s32.totalorder %s19, 1
      %p84 = por %p82, %p83
      %p86 = scmp.ne.s32.totalorder %s71, %s85
      %p87 = scmp.eq.s32.totalorder %s19, 0
      %p88 = por %p86, %p87
      %s89 = ssub.s32 %s13, %s20
      %p90 = scmp.eq.s32.totalorder %s89, 0
      %s92 = sadd.s32 %s91, 1
      %s93 = scalar_select %p90, %s91, %s92
      %p96 = pneg %p90
      %p97 = scmp.eq.s32.totalorder %s13, 1
      %p98 = por %p96, %p97
      %p99 = scmp.ne.s32.totalorder %s91, %s94
      %p100 = scmp.eq.s32.totalorder %s13, 0
      %p101 = por %p99, %p100
      %p102 = scmp.ne.s32.totalorder %s91, %s94
      %p103 = scmp.eq.s32.totalorder %s18, 1
      %p104 = por %p102, %p103
      %p105 = scmp.ne.s32.totalorder %s94, %s95
      %p106 = scmp.eq.s32.totalorder %s18, 0
      %p107 = por %p105, %p106
      %p108 = scmp.ne.s32.totalorder %s94, %s95
      %p109 = scmp.eq.s32.totalorder %s19, 1
      %p110 = por %p108, %p109
      %p112 = scmp.ne.s32.totalorder %s95, %s111
      %p113 = scmp.eq.s32.totalorder %s19, 0
      %p114 = por %p112, %p113
      %p115 = scmp.le.s32.totalorder 1, %s13
      %p116 = scmp.lt.s32.totalorder %s13, 3
      %p117 = pnand %p115, %p116
      %p118 = pneg %p117
      // Predicated region
      $region9: #{ccsl_net_forward.1} parent=5 // pred_check
        _
      $region10: #{ccsl_net_forward.1} parent=5 // pred_check_branch
        %120 = sbr.rel (%p117) target = $region12
      $region11: #{ccsl_net_forward.1} parent=5 // pred_region
        %s121 = ssub.s32 %s13, 1
        // Predicated region
        $region13: #{ccsl_net_forward.1} parent=11 // pred_check
          %p122 = pneg %p60
        $region14: #{ccsl_net_forward.1} parent=11 // pred_check_branch
          %124 = sbr.rel (%p122) target = $region16
        $region15: #{ccsl_net_forward.1} parent=11 // pred_region
          %s126 = ssub.s32 5120, 5120
          %127 = vsyncadd [#allocation3], %s126
          %s128 = sshll.u32 [#allocation2], 4
          %s129 = int_to_ptr.vmem [resolvable:$true] %s128
          %134 = dma.hbm_to_vmem [thread:$0]  %s1, 5120, %s129, [#allocation3], 128, 128, 8
        $region16: #{ccsl_net_forward.1} parent=11 // pred_fallthru
          _
        // Predicated region
        $region17: #{ccsl_net_forward.1} parent=11 // pred_check
          %p135 = pneg %p81
        $region18: #{ccsl_net_forward.1} parent=11 // pred_check_branch
          %137 = sbr.rel (%p135) target = $region20
        $region19: #{ccsl_net_forward.1} parent=11 // pred_region
          _
        $region20: #{ccsl_net_forward.1} parent=11 // pred_fallthru
          _
      $region12: #{ccsl_net_forward.1} parent=5 // pred_fallthru
        _
      %p138 = scmp.lt.s32.totalorder %s13, 2
      // Predicated region
      $region21: #{ccsl_net_forward.1} parent=5 // pred_check
        %p139 = pneg %p138
      $region22: #{ccsl_net_forward.1} parent=5 // pred_check_branch
        %141 = sbr.rel (%p139) target = $region24
      $region23: #{ccsl_net_forward.1} parent=5 // pred_region
        // Predicated region
        $region25: #{ccsl_net_forward.1} parent=23 // pred_check
          %p142 = pneg %p33
        $region26: #{ccsl_net_forward.1} parent=23 // pred_check_branch
          %144 = sbr.rel (%p142) target = $region28
        $region27: #{ccsl_net_forward.1} parent=23 // pred_region
          %p145 = scmp.lt.s32.totalorder %s13, 1
          %s146 = scalar_select %p145, %s13, 1
          %s147 = smul.addr %s146, 2
          %s148 = smul.addr %s147, 8
          %s149 = scalar_lea.vmem %s0, %s148
        $region28: #{ccsl_net_forward.1} parent=23 // pred_fallthru
          _
      $region24: #{ccsl_net_forward.1} parent=5 // pred_fallthru
        _
      %p150 = scmp.le.s32.totalorder 1, %s13
      %p151 = scmp.lt.s32.totalorder %s13, 3
      %p152 = pnand %p150, %p151
      %p153 = pneg %p152
      // Predicated region
      $region29: #{ccsl_net_forward.1} parent=5 // pred_check
        _
      $region30: #{ccsl_net_forward.1} parent=5 // pred_check_branch
        %155 = sbr.rel (%p152) target = $region32
      $region31: #{ccsl_net_forward.1} parent=5 // pred_region
        %s156 = ssub.s32 %s13, 1
        // Predicated region
        $region33: #{ccsl_net_forward.1} parent=31 // pred_check
          %p157 = pneg %p60
        $region34: #{ccsl_net_forward.1} parent=31 // pred_check_branch
          %159 = sbr.rel (%p157) target = $region36
        $region35: #{ccsl_net_forward.1} parent=31 // pred_region
          %160 = dma.done [#allocation3], 5120
        $region36: #{ccsl_net_forward.1} parent=31 // pred_fallthru
          _
        %p161 = scmp.lt.s32.totalorder %s18, 1
        %s162 = scalar_select %p161, %s18, 1
        %s163 = smul.addr %s162, 2
        %s164 = smul.addr %s163, 8
        %s165 = scalar_lea.vmem %s0, %s164
        %p166 = pneg %p39
        %p167 = pneg %p36
        %p168 = pneg %p60
        %p169 = pneg %p57
        %p170 = pneg %p81
        %p171 = pneg %p78
        %p172 = pneg %p107
        %p173 = pneg %p104
        %s174 = sand.u32 %s94, 1
        %s175 = scalar_lea.sflag [#allocation4], %s174
        %s176 = sand.u32 %s94, 1
        %s177 = scalar_lea.vmem [#allocation5], %s176
        %p178 = scmp.lt.s32.totalorder %s18, 1
        %s179 = scalar_select %p178, %s18, 1
        %s180 = smul.addr %s179, 2
        %s181 = smul.addr %s180, 8
        %s182 = scalar_lea.vmem %s0, %s181
        %v183 = vld [vmem:[%s182] sm:$0xff]
        %v184 = vld [vmem:[%s182 + $0x8] sm:$0xff]
        %v185 = vld [vmem:[#allocation2] sm:$0xff]
        %v186 = vld [vmem:[#allocation2 + $0x8] sm:$0xff]
        %v187 = vld [vmem:[#allocation2 + $0x10] sm:$0xff]
        %v188 = vld [vmem:[#allocation2 + $0x18] sm:$0xff]
        %v189 = vld [vmem:[#allocation2 + $0x20] sm:$0xff]
        %v190 = vld [vmem:[#allocation2 + $0x28] sm:$0xff]
        %v191 = vld [vmem:[#allocation2 + $0x30] sm:$0xff]
        %v192 = vld [vmem:[#allocation2 + $0x38] sm:$0xff]
        %v193 = vld [vmem:[#allocation2 + $0x40] sm:$0xff]
        %v194 = vld [vmem:[#allocation2 + $0x48] sm:$0xff]
        %v195 = vld [vmem:[#allocation2 + $0x50] sm:$0xff]
        %v196 = vld [vmem:[#allocation2 + $0x58] sm:$0xff]
        %v197 = vld [vmem:[#allocation2 + $0x60] sm:$0xff]
        %v198 = vld [vmem:[#allocation2 + $0x68] sm:$0xff]
        %v199 = vld [vmem:[#allocation2 + $0x70] sm:$0xff]
        %v200 = vld [vmem:[#allocation2 + $0x78] sm:$0xff]
        %v201 = vld [vmem:[#allocation2 + $0x80] sm:$0xff]
        %v202 = vld [vmem:[#allocation2 + $0x88] sm:$0xff]
        %v203 = vld [vmem:[#allocation2 + $0x90] sm:$0xff]
        %v204 = vld [vmem:[#allocation2 + $0x98] sm:$0xff]
        %v205 = vld [vmem:[#allocation2 + $0xa0] sm:$0xff]
        %v206 = vld [vmem:[#allocation2 + $0xa8] sm:$0xff]
        %v207 = vld [vmem:[#allocation2 + $0xb0] sm:$0xff]
        %v208 = vld [vmem:[#allocation2 + $0xb8] sm:$0xff]
        %v209 = vld [vmem:[#allocation2 + $0xc0] sm:$0xff]
        %v210 = vld [vmem:[#allocation2 + $0xc8] sm:$0xff]
        %v211 = vld [vmem:[#allocation2 + $0xd0] sm:$0xff]
        %v212 = vld [vmem:[#allocation2 + $0xd8] sm:$0xff]
        %v213 = vld [vmem:[#allocation2 + $0xe0] sm:$0xff]
        %v214 = vld [vmem:[#allocation2 + $0xe8] sm:$0xff]
        %v215 = vld [vmem:[#allocation2 + $0xf0] sm:$0xff]
        %v216 = vld [vmem:[#allocation2 + $0xf8] sm:$0xff]
        %v217 = vld [vmem:[#allocation2 + $0x100] sm:$0xff]
        %v218 = vld [vmem:[#allocation2 + $0x108] sm:$0xff]
        %v219 = vld [vmem:[#allocation2 + $0x110] sm:$0xff]
        %v220 = vld [vmem:[#allocation2 + $0x118] sm:$0xff]
        %v221 = vld [vmem:[#allocation2 + $0x120] sm:$0xff]
        %v222 = vld [vmem:[#allocation2 + $0x128] sm:$0xff]
        %v223 = vld [vmem:[#allocation2 + $0x130] sm:$0xff]
        %v224 = vld [vmem:[#allocation2 + $0x138] sm:$0xff]
        %v225 = vld [vmem:[%s2] sm:$0x1]
        %v226 = vld [vmem:[%s2 + $0x1] sm:$0x1]
        %v227 = vld [vmem:[%s2 + $0x2] sm:$0x1]
        %vm228 = vcmask 523264
        %v230 = vsel %vm228, %v183, 0
        %v233 = vsel %vm228, %v184, 0
        %235 = vmatprep.subr.mxu0 0.0
        %236 = vmatpush1.msra.mxu0 %v185
        %237 = vmatprep.subr.mxu0 0.0
        %238 = vmatpush1.msra.mxu0 %v186
        %239 = vmatprep.subr.mxu0 0.0
        %240 = vmatpush1.msra.mxu0 %v187
        %241 = vmatprep.subr.mxu0 0.0
        %242 = vmatpush1.msra.mxu0 %v188
        %243 = vmatprep.subr.mxu0 0.0
        %244 = vmatpush1.msra.mxu0 %v189
        %245 = vmatprep.subr.mxu0 0.0
        %246 = vmatpush1.msra.mxu0 %v190
        %247 = vmatprep.subr.mxu0 0.0
        %248 = vmatpush1.msra.mxu0 %v191
        %249 = vmatprep.subr.mxu0 0.0
        %250 = vmatpush1.msra.mxu0 %v192
        %251 = vmatprep.subr.mxu0 0.0
        %252 = vmatpush1.msra.mxu0 0.0
        %253 = vmatprep.subr.mxu0 0.0
        %254 = vmatpush1.msra.mxu0 0.0
        %255 = vmatprep.subr.mxu0 0.0
        %256 = vmatpush1.msra.mxu0 0.0
        %257 = vmatprep.subr.mxu0 0.0
        %258 = vmatpush1.msra.mxu0 0.0
        %259 = vmatprep.subr.mxu0 0.0
        %260 = vmatpush1.msra.mxu0 0.0
        %261 = vmatprep.subr.mxu0 0.0
        %262 = vmatpush1.msra.mxu0 0.0
        %263 = vmatprep.subr.mxu0 0.0
        %264 = vmatpush1.msra.mxu0 0.0
        %265 = vmatprep.subr.mxu0 0.0
        %266 = vmatpush1.msra.mxu0 0.0
        %267 = vmatprep.subr.mxu0 0.0
        %268 = vmatpush1.msra.mxu0 0.0
        %269 = vmatprep.subr.mxu0 0.0
        %270 = vmatpush1.msra.mxu0 0.0
        %271 = vmatprep.subr.mxu0 0.0
        %272 = vmatpush1.msra.mxu0 0.0
        %273 = vmatprep.subr.mxu0 0.0
        %274 = vmatpush1.msra.mxu0 0.0
        %275 = vmatprep.subr.mxu0 0.0
        %276 = vmatpush1.msra.mxu0 0.0
        %277 = vmatprep.subr.mxu0 0.0
        %278 = vmatpush1.msra.mxu0 0.0
        %279 = vmatprep.subr.mxu0 0.0
        %280 = vmatpush1.msra.mxu0 0.0
        %281 = vmatprep.subr.mxu0 0.0
        %282 = vmatpush1.msra.mxu0 0.0
        %283 = vmatprep.subr.mxu0 0.0
        %284 = vmatpush1.msra.mxu0 0.0
        %285 = vmatprep.subr.mxu0 0.0
        %286 = vmatpush1.msra.mxu0 0.0
        %287 = vmatprep.subr.mxu0 0.0
        %288 = vmatpush1.msra.mxu0 0.0
        %289 = vmatprep.subr.mxu0 0.0
        %290 = vmatpush1.msra.mxu0 0.0
        %291 = vmatprep.subr.mxu0 0.0
        %292 = vmatpush1.msra.mxu0 0.0
        %293 = vmatprep.subr.mxu0 0.0
        %294 = vmatpush1.msra.mxu0 0.0
        %295 = vmatprep.subr.mxu0 0.0
        %296 = vmatpush1.msra.mxu0 0.0
        %297 = vmatprep.subr.mxu0 0.0
        %298 = vmatpush1.msra.mxu0 0.0
        %299 = vmatprep.mubr.f32.mxu0 0.0
        %300 = vmatmul.mubr.f32.gmra.mrb[0].mxu0 %v230
        %v301 = vpop.f32.mrb[0].mxu0
        %v302 = vadd.f32 0.0, %v301
        %v303 = vpop.f32.mrb[0].mxu0
        %304 = vmatprep.mubr.f32.mxu0 0.0
        %305 = vmatmul.mubr.f32.gmra.mrb[0].mxu0 %v233
        %v306 = vpop.f32.mrb[0].mxu0
        %v307 = vadd.f32 0.0, %v306
        %v308 = vpop.f32.mrb[0].mxu0
        %309 = vdwg.mxu0
        %v310 = vlaneseq
        %v311 = vshrl.u32 %v310, 7
        %v312 = vsub.s32 0, %v311
        %v313 = vrot.slane %v225, %v312
        %314 = vmatprep.subr.mxu0 0.0
        %315 = vmatpush1.msra.mxu0 %v193
        %316 = vmatprep.subr.mxu0 0.0
        %317 = vmatpush1.msra.mxu0 %v194
        %318 = vmatprep.subr.mxu0 0.0
        %319 = vmatpush1.msra.mxu0 %v195
        %320 = vmatprep.subr.mxu0 0.0
        %321 = vmatpush1.msra.mxu0 %v196
        %322 = vmatprep.subr.mxu0 0.0
        %323 = vmatpush1.msra.mxu0 %v197
        %324 = vmatprep.subr.mxu0 0.0
        %325 = vmatpush1.msra.mxu0 %v198
        %326 = vmatprep.subr.mxu0 0.0
        %327 = vmatpush1.msra.mxu0 %v199
        %328 = vmatprep.subr.mxu0 0.0
        %329 = vmatpush1.msra.mxu0 %v200
        %330 = vmatprep.subr.mxu0 0.0
        %331 = vmatpush1.msra.mxu0 %v201
        %332 = vmatprep.subr.mxu0 0.0
        %333 = vmatpush1.msra.mxu0 %v202
        %334 = vmatprep.subr.mxu0 0.0
        %335 = vmatpush1.msra.mxu0 %v203
        %336 = vmatprep.subr.mxu0 0.0
        %337 = vmatpush1.msra.mxu0 %v204
        %338 = vmatprep.subr.mxu0 0.0
        %339 = vmatpush1.msra.mxu0 %v205
        %340 = vmatprep.subr.mxu0 0.0
        %341 = vmatpush1.msra.mxu0 %v206
        %342 = vmatprep.subr.mxu0 0.0
        %343 = vmatpush1.msra.mxu0 %v207
        %344 = vmatprep.subr.mxu0 0.0
        %345 = vmatpush1.msra.mxu0 %v208
        %346 = vmatprep.subr.mxu0 0.0
        %347 = vmatpush1.msra.mxu0 0.0
        %348 = vmatprep.subr.mxu0 0.0
        %349 = vmatpush1.msra.mxu0 0.0
        %350 = vmatprep.subr.mxu0 0.0
        %351 = vmatpush1.msra.mxu0 0.0
        %352 = vmatprep.subr.mxu0 0.0
        %353 = vmatpush1.msra.mxu0 0.0
        %354 = vmatprep.subr.mxu0 0.0
        %355 = vmatpush1.msra.mxu0 0.0
        %356 = vmatprep.subr.mxu0 0.0
        %357 = vmatpush1.msra.mxu0 0.0
        %358 = vmatprep.subr.mxu0 0.0
        %359 = vmatpush1.msra.mxu0 0.0
        %360 = vmatprep.subr.mxu0 0.0
        %361 = vmatpush1.msra.mxu0 0.0
        %362 = vmatprep.subr.mxu0 0.0
        %363 = vmatpush1.msra.mxu0 0.0
        %364 = vmatprep.subr.mxu0 0.0
        %365 = vmatpush1.msra.mxu0 0.0
        %366 = vmatprep.subr.mxu0 0.0
        %367 = vmatpush1.msra.mxu0 0.0
        %368 = vmatprep.subr.mxu0 0.0
        %369 = vmatpush1.msra.mxu0 0.0
        %370 = vmatprep.subr.mxu0 0.0
        %371 = vmatpush1.msra.mxu0 0.0
        %372 = vmatprep.subr.mxu0 0.0
        %373 = vmatpush1.msra.mxu0 0.0
        %374 = vmatprep.subr.mxu0 0.0
        %375 = vmatpush1.msra.mxu0 0.0
        %376 = vmatprep.subr.mxu0 0.0
        %377 = vmatpush1.msra.mxu0 0.0
        %378 = vmatprep.mubr.f32.mxu0 0.0
        %379 = vmatmul.mubr.f32.gmra.mrb[0].mxu0 %v302
        %v380 = vpop.f32.mrb[0].mxu0
        %v381 = vadd.f32 %v313, %v380
        %v382 = vpop.f32.mrb[0].mxu0
        %383 = vmatprep.mubr.f32.mxu0 0.0
        %384 = vmatmul.mubr.f32.gmra.mrb[0].mxu0 %v307
        %v385 = vpop.f32.mrb[0].mxu0
        %v386 = vadd.f32 %v313, %v385
        %v387 = vpop.f32.mrb[0].mxu0
        %388 = vdwg.mxu0
        %v389 = vtanh.pop %v381
        %v390 = vtanh.pop %v386
        %v391 = vlaneseq
        %v392 = vshrl.u32 %v391, 7
        %v393 = vsub.s32 0, %v392
        %v394 = vrot.slane %v226, %v393
        %v395 = vmul.f32 %v389, %v394
        %v396 = vmul.f32 %v390, %v394
        %397 = vadd.xlane.f32.xlu0 %v395
        %v398 = vpop.xlane.xlu0 %397
        %399 = vadd.xlane.f32.xlu0 %v396
        %v400 = vpop.xlane.xlu0 %399
        %v401 = vlaneseq
        %v402 = vshrl.u32 %v401, 7
        %v403 = vsub.s32 0, %v402
        %v404 = vrot.slane %v227, %v403
        %v405 = vadd.f32 %v398, %v404
        %v406 = vadd.f32 %v400, %v404
        %v407 = vtanh.pop %v405
        %v408 = vtanh.pop %v406
        %vm409 = vcmask 7168
        %v410 = vsel %vm409, %v407, -inf
        %v411 = vsel %vm409, %v408, -inf
        %v412 = vmax.f32 %v410, %v411
        %v413 = vrot.slane %v412, 4
        %v414 = vmax.f32 %v412, %v413
        %v415 = vrot.slane %v414, 2
        %v416 = vmax.f32 %v414, %v415
        %v417 = vrot.slane %v416, 1
        %v418 = vmax.f32 %v416, %v417
        %v419 = vsub.f32 %v407, %v418
        %v420 = vsub.f32 %v408, %v418
        %v421 = vmul.f32 %v419, 1.442695
        %v422 = vpow.pop %v421
        %v423 = vmul.f32 %v420, 1.442695
        %v424 = vpow.pop %v423
        %v425 = vsel %vm409, %v422, 0.0
        %v426 = vsel %vm409, %v424, 0.0
        %v427 = vadd.f32 %v425, %v426
        %v428 = vrot.slane %v427, 4
        %v429 = vadd.f32 %v427, %v428
        %v430 = vrot.slane %v429, 2
        %v431 = vadd.f32 %v429, %v430
        %v432 = vrot.slane %v431, 1
        %v433 = vadd.f32 %v431, %v432
        %v434 = vrcp.pop %v433
        %v435 = vmul.f32 %v422, %v434
        %v436 = vmul.f32 %v424, %v434
        %438 = vset.pattern.permute.xlu0 0
        %439 = vperm.xlu0 %438, %v435
        %v440 = vpop.permute.xlu0 %439
        %443 = vset.pattern.permute.xlu0 0
        %444 = vperm.xlu0 %443, %v436
        %v445 = vpop.permute.xlu0 %444
        %v447 = vmul.f32 %v440, %v302
        %v448 = vmul.f32 %v445, %v307
        %v449 = vadd.f32 %v447, %v448
        %v450 = vrot.slane %v449, 4
        %v451 = vadd.f32 %v449, %v450
        %v452 = vrot.slane %v451, 2
        %v453 = vadd.f32 %v451, %v452
        %v454 = vrot.slane %v453, 1
        %v455 = vadd.f32 %v453, %v454
        %456 = vmatprep.subr.mxu0 0.0
        %457 = vmatpush1.msra.mxu0 %v209
        %458 = vmatprep.subr.mxu0 0.0
        %459 = vmatpush1.msra.mxu0 %v210
        %460 = vmatprep.subr.mxu0 0.0
        %461 = vmatpush1.msra.mxu0 %v211
        %462 = vmatprep.subr.mxu0 0.0
        %463 = vmatpush1.msra.mxu0 %v212
        %464 = vmatprep.subr.mxu0 0.0
        %465 = vmatpush1.msra.mxu0 %v213
        %466 = vmatprep.subr.mxu0 0.0
        %467 = vmatpush1.msra.mxu0 %v214
        %468 = vmatprep.subr.mxu0 0.0
        %469 = vmatpush1.msra.mxu0 %v215
        %470 = vmatprep.subr.mxu0 0.0
        %471 = vmatpush1.msra.mxu0 %v216
        %472 = vmatprep.subr.mxu0 0.0
        %473 = vmatpush1.msra.mxu0 %v217
        %474 = vmatprep.subr.mxu0 0.0
        %475 = vmatpush1.msra.mxu0 %v218
        %476 = vmatprep.subr.mxu0 0.0
        %477 = vmatpush1.msra.mxu0 %v219
        %478 = vmatprep.subr.mxu0 0.0
        %479 = vmatpush1.msra.mxu0 %v220
        %480 = vmatprep.subr.mxu0 0.0
        %481 = vmatpush1.msra.mxu0 %v221
        %482 = vmatprep.subr.mxu0 0.0
        %483 = vmatpush1.msra.mxu0 %v222
        %484 = vmatprep.subr.mxu0 0.0
        %485 = vmatpush1.msra.mxu0 %v223
        %486 = vmatprep.subr.mxu0 0.0
        %487 = vmatpush1.msra.mxu0 %v224
        %488 = vmatprep.subr.mxu0 0.0
        %489 = vmatpush1.msra.mxu0 0.0
        %490 = vmatprep.subr.mxu0 0.0
        %491 = vmatpush1.msra.mxu0 0.0
        %492 = vmatprep.subr.mxu0 0.0
        %493 = vmatpush1.msra.mxu0 0.0
        %494 = vmatprep.subr.mxu0 0.0
        %495 = vmatpush1.msra.mxu0 0.0
        %496 = vmatprep.subr.mxu0 0.0
        %497 = vmatpush1.msra.mxu0 0.0
        %498 = vmatprep.subr.mxu0 0.0
        %499 = vmatpush1.msra.mxu0 0.0
        %500 = vmatprep.subr.mxu0 0.0
        %501 = vmatpush1.msra.mxu0 0.0
        %502 = vmatprep.subr.mxu0 0.0
        %503 = vmatpush1.msra.mxu0 0.0
        %504 = vmatprep.subr.mxu0 0.0
        %505 = vmatpush1.msra.mxu0 0.0
        %506 = vmatprep.subr.mxu0 0.0
        %507 = vmatpush1.msra.mxu0 0.0
        %508 = vmatprep.subr.mxu0 0.0
        %509 = vmatpush1.msra.mxu0 0.0
        %510 = vmatprep.subr.mxu0 0.0
        %511 = vmatpush1.msra.mxu0 0.0
        %512 = vmatprep.subr.mxu0 0.0
        %513 = vmatpush1.msra.mxu0 0.0
        %514 = vmatprep.subr.mxu0 0.0
        %515 = vmatpush1.msra.mxu0 0.0
        %516 = vmatprep.subr.mxu0 0.0
        %517 = vmatpush1.msra.mxu0 0.0
        %518 = vmatprep.subr.mxu0 0.0
        %519 = vmatpush1.msra.mxu0 0.0
        %520 = vmatprep.mubr.f32.mxu0 0.0
        %521 = vmatmul.mubr.f32.gmra.mrb[0].mxu0 %v455
        %v522 = vpop.f32.mrb[0].mxu0
        %v523 = vadd.f32 0.0, %v522
        %v524 = vpop.f32.mrb[0].mxu0
        %525 = vdwg.mxu0
        %526 = vst [vmem:[%s177] sm:$0x1] %v523
        %s527 = sand.u32 %s94, 1
        %s528 = scalar_lea.sflag [#allocation4], %s527
        %s529 = sand.u32 %s94, 1
        %s530 = scalar_lea.vmem [#allocation5], %s529
        // Predicated region
        $region37: #{ccsl_net_forward.1} parent=31 // pred_check
          %p531 = pneg %p104
        $region38: #{ccsl_net_forward.1} parent=31 // pred_check_branch
          %533 = sbr.rel (%p531) target = $region40
        $region39: #{ccsl_net_forward.1} parent=31 // pred_region
          %s535 = ssub.s32 16, 16
          %536 = vsyncadd %s528, %s535
          %s537 = smul.addr %s18, 16
          %s538 = scalar_lea.hbm %s3, %s537
          %s540 = sshll.u32 %s530, 4
          %s541 = int_to_ptr.vmem [resolvable:$true] %s540
          %543 = dma.vmem_to_hbm [thread:$0]  %s541, 16, %s538, %s528
        $region40: #{ccsl_net_forward.1} parent=31 // pred_fallthru
          _
      $region32: #{ccsl_net_forward.1} parent=5 // pred_fallthru
        _
      %p544 = scmp.le.s32.totalorder 2, %s13
      // Predicated region
      $region41: #{ccsl_net_forward.1} parent=5 // pred_check
        %p545 = pneg %p544
      $region42: #{ccsl_net_forward.1} parent=5 // pred_check_branch
        %547 = sbr.rel (%p545) target = $region44
      $region43: #{ccsl_net_forward.1} parent=5 // pred_region
        %s548 = ssub.s32 %s13, 2
        // Predicated region
        $region45: #{ccsl_net_forward.1} parent=43 // pred_check
          %p549 = pneg %p110
        $region46: #{ccsl_net_forward.1} parent=43 // pred_check_branch
          %551 = sbr.rel (%p549) target = $region48
        $region47: #{ccsl_net_forward.1} parent=43 // pred_region
          %s552 = sand.u32 %s95, 1
          %s553 = scalar_lea.sflag [#allocation4], %s552
          %s554 = sand.u32 %s95, 1
          %s555 = scalar_lea.vmem [#allocation5], %s554
          %556 = dma.done %s553, 16
        $region48: #{ccsl_net_forward.1} parent=43 // pred_fallthru
          _
      $region44: #{ccsl_net_forward.1} parent=5 // pred_fallthru
        _
    $region6: #{ccsl_net_forward.1} parent=1 // loop_footer
      %s17 = sadd.s32 1, %s13
    $region7: #{ccsl_net_forward.1} parent=1 // loop_footer_branch
      %12 = sbr.rel target = $region3
    $region8: #{ccsl_net_forward.1} parent=1 // loop_exit
      _
    %557 = vsyncpa [#allocation3], 1
    %s558 = scalar_lea.sflag [#allocation3], 1
    %559 = vsyncpa %s558, 1
    %560 = vsyncpa [#allocation4], 1
    %s561 = scalar_lea.sflag [#allocation4], 1
    %562 = vsyncpa %s561, 1

</llo_original>
